<compile_context>
chip_gen: v5e
topology: v5e:2x2
jax: 0.10.0
libtpu: 0.0.40
codegen_flags: <defaults>
</compile_context>

<pallas_src>
import jax
import jax.numpy as jnp
import numpy as np
from jax.experimental import pallas as pl
from jax.experimental.pallas import tpu as pltpu


def _pos_broadcast_kernel(emb_ref, out_ref):
    # emb_ref : (1,  tl) flattened positional-encoding chunk (grid-invariant in batch)
    # out_ref : (bb, tl) flattened output rows for this (batch, lane) block
    # Single dense sublane-broadcast store, in the table's native dtype.
    out_ref[...] = jnp.broadcast_to(emb_ref[...], out_ref.shape)


def learned_positional_encoding_1d(
    seq_in_embeds,
    embedding_table,
    *,
    min_pallas_bytes=1 << 20,          # below this, plain XLA broadcast wins
    block_budget_bytes=4 * 1024 * 1024,  # per output block; v5e/v6e/v7x safe
):
    """Pallas equivalent of LearnedPositionalEncoding1D.forward.

    Args:
      seq_in_embeds:   [bs, seq_len, d_model] — only its shape matters.
      embedding_table: [num_embedding, num_feature] learned weights.

    Returns:
      [bs, seq_len, num_feature] positional embeddings (table dtype).
    """
    bs, seq_len, _ = seq_in_embeds.shape
    num_embedding, num_feature = embedding_table.shape
    assert seq_len <= num_embedding, "seq_len must not exceed num_embedding"

    dtype = embedding_table.dtype
    itemsize = np.dtype(dtype).itemsize
    L = seq_len * num_feature            # flattened per-batch row length
    row_bytes = L * itemsize
    out_bytes = bs * row_bytes

    # Rows actually read (XLA fuses this into the pallas operand, see below).
    emb_rows = jax.lax.slice_in_dim(embedding_table, 0, seq_len, axis=0)

    # Tiny-output bypass: launch overhead dominates, let XLA fuse the broadcast.
    if out_bytes < min_pallas_bytes:
        return jnp.broadcast_to(emb_rows[None, :, :], (bs, seq_len, num_feature))

    # Flattened (1, L) view of the positional rows; row-major, so it is exactly
    # the concatenation emb[0] ++ emb[1] ++ ... ++ emb[seq_len-1].
    emb_flat = emb_rows.reshape(1, L)

    # ---- tiling ------------------------------------------------------------
    if out_bytes <= block_budget_bytes:
        bb, tl = bs, L                   # single block == full array (always legal)
    else:
        bb = (block_budget_bytes // row_bytes) // 8 * 8   # sublane-aligned batch tile
        if bb >= 8:
            tl = L
        else:
            # Even 8 flattened rows exceed the budget -> tile the lane axis too
            # (tl is a multiple of 128, so stores stay lane-dense).
            bb = min(bs, 8)
            tl = min(L, max(128, (block_budget_bytes // (bb * itemsize)) // 128 * 128))

    grid = (pl.cdiv(bs, bb), pl.cdiv(L, tl))

    out_flat = pl.pallas_call(
        _pos_broadcast_kernel,
        out_shape=jax.ShapeDtypeStruct((bs, L), dtype),
        grid=grid,
        in_specs=[
            # Flattened table rows: batch-invariant, tiled only along lanes.
            pl.BlockSpec((1, tl), lambda i, j: (0, j)),
        ],
        out_specs=pl.BlockSpec((bb, tl), lambda i, j: (i, j)),
        compiler_params=pltpu.CompilerParams(
            dimension_semantics=("parallel", "parallel"),
            # Fuse the slice+reshape producer into the operand instead of
            # materializing an extra HBM array before the kernel.
            allow_input_fusion=[True],
        ),
    )(emb_flat)

    # Free row-major reinterpretation back to the module's output shape.
    return out_flat.reshape(bs, seq_len, num_feature)


if __name__ == "__main__":
    # Module defaults: num_embedding=5, num_feature=256, padding_idx=-1
    # (padding_idx only affects gradients in PyTorch; forward ignores it).
    num_embedding = 5
    num_feature = 256
    bs = 2
    seq_len = 5

    key = jax.random.PRNGKey(0)
    k_emb, k_x = jax.random.split(key)

    # nn.Embedding default init: N(0, 1).
    embedding_table = jax.random.normal(
        k_emb, (num_embedding, num_feature), dtype=jnp.float32
    )
    # seq_in_embeds: only its shape is used by the forward pass.
    seq_in_embeds = jax.random.normal(
        k_x, (bs, seq_len, num_feature), dtype=jnp.float32
    )

    ref = jnp.broadcast_to(
        embedding_table[jnp.arange(seq_len)], (bs, seq_len, num_feature)
    )

    # Force the Pallas path (real callers keep the tiny-output bypass).
    out = learned_positional_encoding_1d(
        seq_in_embeds, embedding_table, min_pallas_bytes=0
    )
    out = jax.block_until_ready(out)
    assert out.shape == (bs, seq_len, num_feature)
    assert out.dtype == embedding_table.dtype
    assert jnp.array_equal(out, ref), "mismatch vs reference (single-block path)"

    # Also exercise the multi-block path (ragged cdiv batch tiles + lane tiling)
    # with a tiny budget so it is covered at small shapes.
    bs2 = 18
    x2 = jax.random.normal(
        jax.random.PRNGKey(1), (bs2, seq_len, num_feature), dtype=jnp.float32
    )
    out2 = jax.block_until_ready(
        learned_positional_encoding_1d(
            x2, embedding_table, min_pallas_bytes=0, block_budget_bytes=8 * 1024
        )
    )
    ref2 = jnp.broadcast_to(
        embedding_table[jnp.arange(seq_len)], (bs2, seq_len, num_feature)
    )
    assert jnp.array_equal(out2, ref2), "mismatch vs reference (tiled path)"

    print("KERNEL_OK")
</pallas_src>

<mosaic_0001>
module attributes {stable_mosaic.version = 11 : i64} {
  func.func @_pos_broadcast_kernel(%arg0: i32, %arg1: i32, %arg2: memref<1x1280xf32, #tpu.memory_space<vmem>>, %arg3: memref<2x1280xf32, #tpu.memory_space<vmem>>) attributes {dimension_semantics = [#tpu.dimension_semantics<parallel>, #tpu.dimension_semantics<parallel>], iteration_bounds = array<i64: 1, 1>, scalar_prefetch = 0 : i64, scratch_operands = 0 : i64, tpu.core_type = #tpu.core_type<tc>, window_params = [{transform_indices = @transform_0, window_bounds = array<i64: 1, 1280>}, {transform_indices = @transform_1, window_bounds = array<i64: 2, 1280>}]} {
    %c0 = arith.constant 0 : index
    %c0_0 = arith.constant 0 : index
    %0 = vector.load %arg2[%c0, %c0_0] : memref<1x1280xf32, #tpu.memory_space<vmem>>, vector<1x1280xf32>
    %1 = vector.shape_cast %0 : vector<1x1280xf32> to vector<1x1280xf32>
    %2 = vector.broadcast %1 : vector<1x1280xf32> to vector<2x1280xf32>
    %c0_1 = arith.constant 0 : index
    %c0_2 = arith.constant 0 : index
    %3 = vector.load %arg3[%c0_1, %c0_2] : memref<2x1280xf32, #tpu.memory_space<vmem>>, vector<2x1280xf32>
    tpu.vector_store %arg3[%c0_1, %c0_2], %2 {strides = array<i32>} : memref<2x1280xf32, #tpu.memory_space<vmem>>, vector<2x1280xf32>,
    return
  }
  func.func @transform_0(%arg0: i32, %arg1: i32) -> (i32, i32) {
    %c0_i32 = arith.constant 0 : i32
    %c0_i32_0 = arith.constant 0 : i32
    return %c0_i32, %arg1 : i32, i32
  }
  func.func @transform_1(%arg0: i32, %arg1: i32) -> (i32, i32) {
    %c0_i32 = arith.constant 0 : i32
    return %arg0, %arg1 : i32, i32
  }
}

</mosaic_0001>

<llo_original>
// kernel: tpu_custom_call.1
$region0: #{tpu_custom_call.1}
  #allocation0 [shape = 'u32[]', space=smem, size = 0x4, offset = 0x4, fixed_abs, tag = 'smem constant byte address 0x4 - core index']
  #allocation1 [shape = 'u32[72,128]{1,0:T(1,128)}', space=vmem, size = 0x9000, scoped, tag = 'internal scratch']
  %s0 = inlined_call_operand.hbm [shape: f32[1,1280], index: 0, kind: input, shape index: {}]
  %s1 = inlined_call_operand.hbm [shape: f32[2,1280], index: 1, kind: output, shape index: {}]
  %s2 = sld [smem:[#allocation0]]
  $region18: #{tpu_custom_call.1} parent=0
    _
  %s4 = ssub.s32 1, %s2
  %s5 = scalar_select 0, %s4, %s2
  $region1: #{tpu_custom_call.1} parent=0
    #allocation2 [shape = 'u8[5120]{0}', space=vmem, size = 0x1400, scoped, tag = 'input window, operand 0, single buffered']
    #allocation3 [shape = 's32[1]{0}', space=sflag, size = 0x4, scoped, tag = 'scoped memory for tpu_custom_call.1']
    #allocation4 [shape = 's32[1]{0}', space=sflag, size = 0x4, scoped, tag = 'scoped memory for tpu_custom_call.1']
    #allocation5 [shape = 'u8[10240]{0}', space=vmem, size = 0x2800, scoped, tag = 'output window, operand 0, single buffered']
    %6 = vsyncpa [#allocation3], 0
    %7 = vsyncpa [#allocation4], 0
    // Predicated region
    $region2: #{tpu_custom_call.1} parent=1 // pred_check
      _
    $region3: #{tpu_custom_call.1} parent=1 // pred_check_branch
      %9 = sbr.rel (0) target = $region5
    $region4: #{tpu_custom_call.1} parent=1 // pred_region
      %11 = vsyncadd [#allocation3], 0
      %s13 = sshll.u32 %s0, 4
      %s14 = int_to_ptr.hbm [resolvable:$true] %s13
      %s15 = sshll.u32 [#allocation2], 4
      %s16 = int_to_ptr.vmem [resolvable:$true] %s15
      %18 = dma.hbm_to_vmem [thread:$0]  %s14, 160, %s16, [#allocation3]
    $region5: #{tpu_custom_call.1} parent=1 // pred_fallthru
      _
    // Predicated region
    $region6: #{tpu_custom_call.1} parent=1 // pred_check
      _
    $region7: #{tpu_custom_call.1} parent=1 // pred_check_branch
      %20 = sbr.rel (0) target = $region9
    $region8: #{tpu_custom_call.1} parent=1 // pred_region
      %22 = dma.done [#allocation3], 160
    $region9: #{tpu_custom_call.1} parent=1 // pred_fallthru
      _
    %v23 = vld [vmem:[#allocation2] sm:$0xff]
    %v24 = vld [vmem:[#allocation2 + $0x8] sm:$0x3]
    %v27 = vperm.slane %v23, 0
    %v28 = vperm.slane %v23, 1
    %v29 = vperm.slane %v23, 2
    %v30 = vperm.slane %v23, 3
    %v31 = vperm.slane %v23, 4
    %v32 = vperm.slane %v23, 5
    %v33 = vperm.slane %v23, 6
    %v34 = vperm.slane %v23, 7
    %v35 = vperm.slane %v24, 0
    %v36 = vperm.slane %v24, 1
    %v37 = vrot.slane %v28, 6
    %v38 = vrot.slane %v29, 4
    %v39 = vrot.slane %v30, 2
    %v40 = vrot.slane %v32, 6
    %v41 = vrot.slane %v33, 4
    %v42 = vrot.slane %v34, 2
    %v43 = vrot.slane %v36, 6
    %vm44 = vcmask 1041408
    %v45 = vsel %vm44, %v27, %v37
    %vm46 = vcmask 1045508
    %v47 = vsel %vm46, %v38, %v39
    %vm48 = vcmask 1043456
    %v49 = vsel %vm48, %v45, %v47
    %v50 = vsel %vm44, %v31, %v40
    %v51 = vsel %vm46, %v41, %v42
    %v52 = vsel %vm48, %v50, %v51
    %v53 = vsel %vm44, %v35, %v43
    %57 = vst [vmem:[#allocation5] sm:$0xff] %v49
    %58 = vst [vmem:[#allocation5 + $0x8] sm:$0xff] %v52
    %59 = vst [vmem:[#allocation5 + $0x10] sm:$0xf] %v53
    // Predicated region
    $region10: #{tpu_custom_call.1} parent=1 // pred_check
      _
    $region11: #{tpu_custom_call.1} parent=1 // pred_check_branch
      %61 = sbr.rel (0) target = $region13
    $region12: #{tpu_custom_call.1} parent=1 // pred_region
      %63 = vsyncadd [#allocation4], 0
      %s65 = sshll.u32 [#allocation5], 4
      %s66 = int_to_ptr.vmem [resolvable:$true] %s65
      %s67 = sshll.u32 %s1, 4
      %s68 = int_to_ptr.hbm [resolvable:$true] %s67
      %70 = dma.vmem_to_hbm [thread:$0]  %s66, 320, %s68, [#allocation4]
    $region13: #{tpu_custom_call.1} parent=1 // pred_fallthru
      _
    // Predicated region
    $region14: #{tpu_custom_call.1} parent=1 // pred_check
      _
    $region15: #{tpu_custom_call.1} parent=1 // pred_check_branch
      %72 = sbr.rel (0) target = $region17
    $region16: #{tpu_custom_call.1} parent=1 // pred_region
      %74 = dma.done [#allocation4], 320
    $region17: #{tpu_custom_call.1} parent=1 // pred_fallthru
      _
    %75 = vsyncpa [#allocation3], 1
    %76 = vsyncpa [#allocation4], 1

</llo_original>
